<compile_context>
chip_gen: v7x
topology: tpu7x:2x2x1
jax: 0.10.0
libtpu: 0.0.40
codegen_flags: <defaults>
</compile_context>

<pallas_src>
import functools
import math

import jax
import jax.numpy as jnp
from jax.experimental import pallas as pl
from jax.experimental.pallas import tpu as pltpu


# --------------------------------------------------------------------------
# NF4 quantization simulation (bitsandbytes Linear4bit, quant_type='nf4')
# --------------------------------------------------------------------------
_NF4_CODEBOOK = jnp.array(
    [
        -1.0, -0.6961928009986877, -0.5250730514526367, -0.39491748809814453,
        -0.28444138169288635, -0.18477343022823334, -0.09105003625154495, 0.0,
        0.07958029955625534, 0.16093020141124725, 0.24611230194568634,
        0.33791524171829224, 0.44070982933044434, 0.5626170039176941,
        0.7229568362236023, 1.0,
    ],
    dtype=jnp.float32,
)
_NF4_BOUNDARIES = (_NF4_CODEBOOK[:-1] + _NF4_CODEBOOK[1:]) * 0.5
_NF4_BLOCKSIZE = 64  # bitsandbytes default 4-bit block size


def nf4_quant_dequant(w: jnp.ndarray) -> jnp.ndarray:
    """Simulate NF4 block-wise quantize + dequantize of a weight matrix."""
    # TODO(synk): compress_statistics=True (8-bit double quantization of the
    # absmax statistics) is not simulated; absmax stays in float32.
    orig_shape = w.shape
    flat = w.reshape(-1).astype(jnp.float32)
    n = flat.shape[0]
    pad = (-n) % _NF4_BLOCKSIZE
    if pad:
        flat = jnp.pad(flat, (0, pad))
    blocks = flat.reshape(-1, _NF4_BLOCKSIZE)
    absmax = jnp.max(jnp.abs(blocks), axis=1, keepdims=True)
    absmax = jnp.where(absmax == 0.0, 1.0, absmax)
    normed = blocks / absmax                                   # in [-1, 1]
    idx = jnp.searchsorted(_NF4_BOUNDARIES, normed)
    deq = _NF4_CODEBOOK[idx] * absmax
    return deq.reshape(-1)[:n].reshape(orig_shape)


def _round_up(x: int, m: int) -> int:
    return ((x + m - 1) // m) * m


@functools.lru_cache(maxsize=1)
def _vmem_capacity_bytes() -> int:
    try:
        return int(pltpu.get_tpu_info().vmem_capacity_bytes)
    except Exception:
        return 64 * 1024 * 1024  # conservative (v7x-sized) fallback


# --------------------------------------------------------------------------
# Pallas kernels
# --------------------------------------------------------------------------
def _qlora_kernel_1d(x_ref, a_ref, b_ref, o_ref):
    # x_ref: (tm, in)        native dtype (cast to bf16 here, on the VPU)
    # a_ref: (in, rank_pad)  bf16, VMEM-resident across the whole grid
    # b_ref: (rank_pad, out) bf16, VMEM-resident, scaling pre-folded
    # o_ref: (tm, out)       out dtype (bf16 by default)
    xb = x_ref[...].astype(jnp.bfloat16)
    inter = jnp.dot(xb, a_ref[...], preferred_element_type=jnp.float32)
    out = jnp.dot(inter.astype(jnp.bfloat16), b_ref[...],
                  preferred_element_type=jnp.float32)
    o_ref[...] = out.astype(o_ref.dtype)


def _qlora_kernel_2d(x_ref, a_ref, b_ref, o_ref, inter_ref, *, tn):
    # Fallback for huge out_features: out tiled, B fully resident and sliced.
    # NOTE: relies on the out-feature axis (j) being the innermost,
    # sequentially executed ("arbitrary") grid axis so the x@A intermediate
    # computed at j == 0 is still valid for the later j of the same M tile.
    j = pl.program_id(1)

    @pl.when(j == 0)
    def _():
        xb = x_ref[...].astype(jnp.bfloat16)
        inter = jnp.dot(xb, a_ref[...], preferred_element_type=jnp.float32)
        inter_ref[...] = inter.astype(inter_ref.dtype)

    col0 = pl.multiple_of(j * tn, 128)
    b_tile = b_ref[:, pl.ds(col0, tn)]
    out = jnp.dot(inter_ref[...], b_tile, preferred_element_type=jnp.float32)
    o_ref[...] = out.astype(o_ref.dtype)


# --------------------------------------------------------------------------
# Forward wrapper
# --------------------------------------------------------------------------
@functools.partial(jax.jit, static_argnames=("out_dtype",))
def _qlora_forward_impl(x, a_p, b_p, out_dtype):
    *lead, in_features = x.shape
    m = math.prod(lead)
    rank_pad = a_p.shape[1]
    out_features = b_p.shape[1]

    x2d = x.reshape(m, in_features)          # metadata-only for contiguous x
    x_is = x.dtype.itemsize
    o_is = jnp.dtype(out_dtype).itemsize
    w_bytes = (a_p.size + b_p.size) * a_p.dtype.itemsize

    # ---- VMEM budget / tile sizes, per TPU generation ----
    cap = _vmem_capacity_bytes()             # 128 MiB v5e/v6e, 64 MiB v7x
    vmem_limit = int(cap * 0.75)             # ~96 MiB on v5e/v6e, 48 MiB v7x
    budget = int(vmem_limit * 0.9)

    tm_cap = _round_up(m, 16)
    tm_cands = (2048, 1024, 512, 256, 128, 64, 32, 16)

    def fits_1d(t):
        # x tile + out tile double-buffered, A/B resident (counted x2 to be safe)
        return (2 * t * in_features * x_is
                + 2 * t * out_features * o_is
                + 2 * w_bytes) <= budget

    tm_1d = None
    for cand in tm_cands:
        t = min(cand, tm_cap)
        if fits_1d(t):
            tm_1d = t
            break

    cost = pl.CostEstimate(
        flops=2 * m * rank_pad * (in_features + out_features),
        transcendentals=0,
        bytes_accessed=m * in_features * x_is + w_bytes
        + m * out_features * o_is,
    )

    if tm_1d is not None:
        # -------- 1-D grid over M: A and B resident, one clean pipeline ------
        tm = tm_1d
        grid = (pl.cdiv(m, tm),)
        out2d = pl.pallas_call(
            _qlora_kernel_1d,
            out_shape=jax.ShapeDtypeStruct((m, out_features), out_dtype),
            grid=grid,
            in_specs=[
                pl.BlockSpec((tm, in_features), lambda i: (i, 0)),   # x tile
                pl.BlockSpec(a_p.shape, lambda i: (0, 0)),           # A resident
                pl.BlockSpec(b_p.shape, lambda i: (0, 0)),           # B resident
            ],
            out_specs=pl.BlockSpec((tm, out_features), lambda i: (i, 0)),
            compiler_params=pltpu.CompilerParams(
                # "parallel" lets v7x's two TensorCores split the M tiles.
                dimension_semantics=("parallel",),
                vmem_limit_bytes=vmem_limit,
            ),
            cost_estimate=cost,
        )(x2d, a_p, b_p)
    else:
        # -------- 2-D fallback: tile out-features, B stays resident ----------
        def fits_2d_x(t):
            return (2 * t * in_features * x_is + 2 * w_bytes
                    + t * rank_pad * 2) <= (budget * 2) // 3

        tm = 16
        for cand in tm_cands:
            t = min(cand, tm_cap)
            if fits_2d_x(t):
                tm = t
                break

        tn = 128
        for cand in (2048, 1024, 512, 256, 128):
            if 2 * tm * cand * o_is <= budget // 3:
                tn = cand
                break
        tn = min(tn, _round_up(out_features, 128))

        # Pad B's out dim (weights only, tiny) so the in-kernel pl.ds slice of
        # the resident B never goes out of bounds on the last j tile.
        out_pad_b = _round_up(out_features, tn)
        b_use = b_p if out_pad_b == out_features else jnp.pad(
            b_p, ((0, 0), (0, out_pad_b - out_features)))

        grid = (pl.cdiv(m, tm), out_pad_b // tn)
        out2d = pl.pallas_call(
            functools.partial(_qlora_kernel_2d, tn=tn),
            out_shape=jax.ShapeDtypeStruct((m, out_features), out_dtype),
            grid=grid,
            in_specs=[
                pl.BlockSpec((tm, in_features), lambda i, j: (i, 0)),
                pl.BlockSpec(a_p.shape, lambda i, j: (0, 0)),
                pl.BlockSpec(b_use.shape, lambda i, j: (0, 0)),
            ],
            out_specs=pl.BlockSpec((tm, tn), lambda i, j: (i, j)),
            scratch_shapes=[pltpu.VMEM((tm, rank_pad), jnp.bfloat16)],
            compiler_params=pltpu.CompilerParams(
                dimension_semantics=("parallel", "arbitrary"),
                vmem_limit_bytes=vmem_limit,
            ),
            cost_estimate=cost,
        )(x2d, a_p, b_use)

    return out2d.reshape(*lead, out_features)   # metadata-only


def qlora_forward(x, a_p, b_p, out_dtype=jnp.bfloat16):
    """x: (..., in_features) -> (..., out_features) in `out_dtype` (bf16 default)."""
    return _qlora_forward_impl(x, a_p, b_p, jnp.dtype(out_dtype))


# --------------------------------------------------------------------------
# Parameter construction (deterministic, mirrors QLoRALayer.__init__).
# All weight prep (NF4 quant/dequant, transpose, rank padding to 128 lanes,
# alpha/rank scaling fold, bf16 cast) is done once here, off the hot path.
# --------------------------------------------------------------------------
def init_qlora_params(key, in_features, out_features, rank=8, alpha=32):
    # lora_A.weight: (rank, in_features), kaiming_uniform_(a=sqrt(5))
    #   => bound = 1 / sqrt(fan_in)
    bound = 1.0 / math.sqrt(in_features)
    w_a = jax.random.uniform(
        key, (rank, in_features), minval=-bound, maxval=bound, dtype=jnp.float32
    )
    # lora_B.weight: (out_features, rank), zeros
    w_b = jnp.zeros((out_features, rank), dtype=jnp.float32)

    w_a_q = nf4_quant_dequant(w_a)
    w_b_q = nf4_quant_dequant(w_b)

    scaling = alpha / rank
    rank_pad = _round_up(rank, 128)
    a_p = jnp.zeros((in_features, rank_pad), jnp.bfloat16).at[:, :rank].set(
        w_a_q.T.astype(jnp.bfloat16))
    b_p = jnp.zeros((rank_pad, out_features), jnp.bfloat16).at[:rank, :].set(
        (w_b_q.T * scaling).astype(jnp.bfloat16))
    return a_p, b_p


# --------------------------------------------------------------------------
# Reference (pure JAX, same bf16 compute path) for sanity checking
# --------------------------------------------------------------------------
def qlora_ref(x, a_p, b_p, out_dtype=jnp.bfloat16):
    in_features = x.shape[-1]
    out_features = b_p.shape[1]
    m = math.prod(x.shape[:-1])
    xb = x.reshape(m, in_features).astype(jnp.bfloat16)
    inter = jnp.dot(xb, a_p, preferred_element_type=jnp.float32).astype(jnp.bfloat16)
    out = jnp.dot(inter, b_p, preferred_element_type=jnp.float32)
    return out.reshape(x.shape[:-1] + (out_features,)).astype(out_dtype)


if __name__ == "__main__":
    key = jax.random.PRNGKey(0)
    k_w, k_x, k_b, k_x2 = jax.random.split(key, 4)

    # ---- small shapes matching the module's forward (batch, seq, hidden) ----
    batch, seq, in_features, out_features, rank, alpha = 2, 8, 32, 32, 8, 32
    a_p, b_p = init_qlora_params(
        k_w, in_features, out_features, rank=rank, alpha=alpha
    )
    x = jax.random.normal(k_x, (batch, seq, in_features), dtype=jnp.float32)

    out = jax.block_until_ready(qlora_forward(x, a_p, b_p))
    assert out.shape == (batch, seq, out_features)
    assert out.dtype == jnp.dtype(jnp.bfloat16)
    # lora_B is zero-initialized, so the module's forward output is exactly 0.
    assert jnp.allclose(out.astype(jnp.float32), 0.0, atol=1e-6)

    # ---- larger correctness check with a non-zero B ----
    b2, s2, in2, out2, rank2 = 2, 512, 256, 640, 8
    a2_p, _ = init_qlora_params(k_w, in2, out2, rank=rank2, alpha=alpha)
    rank_pad2 = a2_p.shape[1]
    w_b2 = 0.05 * jax.random.normal(k_b, (out2, rank2), dtype=jnp.float32)
    b2_q = nf4_quant_dequant(w_b2).T * (alpha / rank2)        # (rank2, out2)
    b2_p = jnp.zeros((rank_pad2, out2), jnp.bfloat16).at[:rank2, :].set(
        b2_q.astype(jnp.bfloat16))
    x2 = jax.random.normal(k_x2, (b2, s2, in2), dtype=jnp.float32)

    out_k = jax.block_until_ready(qlora_forward(x2, a2_p, b2_p))
    out_r = qlora_ref(x2, a2_p, b2_p)
    assert out_k.shape == (b2, s2, out2)
    assert jnp.allclose(out_k.astype(jnp.float32), out_r.astype(jnp.float32),
                        atol=2e-2, rtol=2e-2)

    print("KERNEL_OK")
</pallas_src>

<mosaic_0001>
module attributes {stable_mosaic.version = 11 : i64} {
  func.func @_qlora_kernel_1d(%arg0: i32, %arg1: memref<16x32xf32, #tpu.memory_space<vmem>>, %arg2: memref<32x128xbf16, #tpu.memory_space<vmem>>, %arg3: memref<128x32xbf16, #tpu.memory_space<vmem>>, %arg4: memref<16x32xbf16, #tpu.memory_space<vmem>>) attributes {dimension_semantics = [#tpu.dimension_semantics<parallel>], iteration_bounds = array<i64: 1>, scalar_prefetch = 0 : i64, scratch_operands = 0 : i64, tpu.core_type = #tpu.core_type<tc>, window_params = [{transform_indices = @transform_0, window_bounds = array<i64: 16, 32>}, {pipeline_mode = #tpu.pipeline_mode<synchronous>, transform_indices = @transform_1, window_bounds = array<i64: 32, 128>}, {pipeline_mode = #tpu.pipeline_mode<synchronous>, transform_indices = @transform_2, window_bounds = array<i64: 128, 32>}, {transform_indices = @transform_3, window_bounds = array<i64: 16, 32>}]} {
    %c0 = arith.constant 0 : index
    %c0_0 = arith.constant 0 : index
    %0 = vector.load %arg1[%c0, %c0_0] : memref<16x32xf32, #tpu.memory_space<vmem>>, vector<16x32xf32>
    %1 = arith.truncf %0 : vector<16x32xf32> to vector<16x32xbf16>
    %c0_1 = arith.constant 0 : index
    %c0_2 = arith.constant 0 : index
    %2 = vector.load %arg2[%c0_1, %c0_2] : memref<32x128xbf16, #tpu.memory_space<vmem>>, vector<32x128xbf16>
    %cst = arith.constant dense<0.000000e+00> : vector<16x128xf32>
    %3 = tpu.matmul %1, %2, %cst {dimension_numbers = #tpu.dot_dimension_numbers<[1], [0], [0], [1], [0, 0, 1, 1], [], []>} : vector<16x32xbf16>, vector<32x128xbf16>, vector<16x128xf32> -> vector<16x128xf32>
    %4 = arith.truncf %3 : vector<16x128xf32> to vector<16x128xbf16>
    %c0_3 = arith.constant 0 : index
    %c0_4 = arith.constant 0 : index
    %5 = vector.load %arg3[%c0_3, %c0_4] : memref<128x32xbf16, #tpu.memory_space<vmem>>, vector<128x32xbf16>
    %cst_5 = arith.constant dense<0.000000e+00> : vector<16x32xf32>
    %6 = tpu.matmul %4, %5, %cst_5 {dimension_numbers = #tpu.dot_dimension_numbers<[1], [0], [0], [1], [0, 0, 1, 1], [], []>} : vector<16x128xbf16>, vector<128x32xbf16>, vector<16x32xf32> -> vector<16x32xf32>
    %7 = arith.truncf %6 : vector<16x32xf32> to vector<16x32xbf16>
    %c0_6 = arith.constant 0 : index
    %c0_7 = arith.constant 0 : index
    %8 = vector.load %arg4[%c0_6, %c0_7] : memref<16x32xbf16, #tpu.memory_space<vmem>>, vector<16x32xbf16>
    tpu.vector_store %arg4[%c0_6, %c0_7], %7 {strides = array<i32>} : memref<16x32xbf16, #tpu.memory_space<vmem>>, vector<16x32xbf16>,
    return
  }
  func.func @transform_0(%arg0: i32) -> (i32, i32) {
    %c0_i32 = arith.constant 0 : i32
    %c0_i32_0 = arith.constant 0 : i32
    return %arg0, %c0_i32 : i32, i32
  }
  func.func @transform_1(%arg0: i32) -> (i32, i32) {
    %c0_i32 = arith.constant 0 : i32
    %c0_i32_0 = arith.constant 0 : i32
    %c0_i32_1 = arith.constant 0 : i32
    return %c0_i32, %c0_i32_0 : i32, i32
  }
  func.func @transform_2(%arg0: i32) -> (i32, i32) {
    %c0_i32 = arith.constant 0 : i32
    %c0_i32_0 = arith.constant 0 : i32
    %c0_i32_1 = arith.constant 0 : i32
    return %c0_i32, %c0_i32_0 : i32, i32
  }
  func.func @transform_3(%arg0: i32) -> (i32, i32) {
    %c0_i32 = arith.constant 0 : i32
    %c0_i32_0 = arith.constant 0 : i32
    return %arg0, %c0_i32 : i32, i32
  }
}

</mosaic_0001>

<llo_original>
// kernel: _qlora_forward_impl.1
$region0: #{_qlora_forward_impl.1}
  #allocation0 [shape = 'u32[]', space=smem, size = 0x4, offset = 0x4, fixed_abs, tag = 'smem constant byte address 0x4 - core index']
  #allocation1 [shape = 'u32[144,128]{1,0:T(1,128)}', space=vmem, size = 0x12000, scoped, tag = 'internal scratch']
  %s0 = inlined_call_operand.vmem [shape: f32[16,32], index: 0, kind: input, shape index: {}]
  %s1 = inlined_call_operand.vmem [shape: bf16[32,128], index: 1, kind: input, shape index: {}]
  %s2 = inlined_call_operand.vmem [shape: bf16[128,32], index: 2, kind: input, shape index: {}]
  %s3 = inlined_call_operand.hbm [shape: bf16[16,32], index: 3, kind: output, shape index: {}]
  %s4 = sld [smem:[#allocation0]]
  $region22: #{_qlora_forward_impl.1} parent=0
    _
  %s6 = ssub.s32 1, %s4
  %s7 = scalar_select 0, %s6, %s4
  $region1: #{_qlora_forward_impl.1} parent=0
    #allocation2 [shape = 'u8[4096]{0}', space=vmem, size = 0x1000, scoped, tag = 'output window, operand 0, single buffered']
    #allocation3 [shape = 's32[1]{0}', space=sflag, size = 0x4, scoped, tag = 'scoped memory for _qlora_forward_impl.1']
    %8 = vsyncpa [#allocation3], 0
    // Predicated region
    $region2: #{_qlora_forward_impl.1} parent=1 // pred_check
      _
    $region3: #{_qlora_forward_impl.1} parent=1 // pred_check_branch
      %10 = sbr.rel (0) target = $region5
    $region4: #{_qlora_forward_impl.1} parent=1 // pred_region
      _
    $region5: #{_qlora_forward_impl.1} parent=1 // pred_fallthru
      _
    // Predicated region
    $region6: #{_qlora_forward_impl.1} parent=1 // pred_check
      _
    $region7: #{_qlora_forward_impl.1} parent=1 // pred_check_branch
      %12 = sbr.rel (0) target = $region9
    $region8: #{_qlora_forward_impl.1} parent=1 // pred_region
      _
    $region9: #{_qlora_forward_impl.1} parent=1 // pred_fallthru
      _
    // Predicated region
    $region10: #{_qlora_forward_impl.1} parent=1 // pred_check
      _
    $region11: #{_qlora_forward_impl.1} parent=1 // pred_check_branch
      %14 = sbr.rel (0) target = $region13
    $region12: #{_qlora_forward_impl.1} parent=1 // pred_region
      _
    $region13: #{_qlora_forward_impl.1} parent=1 // pred_fallthru
      _
    %v16 = vld [vmem:[%s0] sm:$0xff]
    %v17 = vld [vmem:[%s0 + $0x8] sm:$0xff]
    %v18 = vpack.c.bf16 %v17, %v16
    %v19 = vld [vmem:[%s1] sm:$0xf]
    %v20 = vld [vmem:[%s1 + $0x4] sm:$0xf]
    %v21 = vld [vmem:[%s1 + $0x8] sm:$0xf]
    %v22 = vld [vmem:[%s1 + $0xc] sm:$0xf]
    %v27 = vunpack.c.l.b16 %v19
    %v28 = vunpack.c.l.b16 %v20
    %v29 = vunpack.c.l.b16 %v21
    %v30 = vunpack.c.l.b16 %v22
    %v31 = vpack.c.b16 %v28, %v27
    %v32 = vpack.c.b16 %v30, %v29
    %vm35 = vcmask 261120
    %v37 = vsel %vm35, %v18, 0
    %39 = vmatprep.subr.bf16.mxu0 0
    %40 = vmatpush1.bf16.msra.mxu0 %v31
    %41 = vmatprep.subr.bf16.mxu0 0
    %42 = vmatpush1.bf16.msra.mxu0 %v32
    %43 = vmatprep.subr.bf16.mxu0 0
    %44 = vmatpush1.bf16.msra.mxu0 0
    %45 = vmatprep.subr.bf16.mxu0 0
    %46 = vmatpush1.bf16.msra.mxu0 0
    %47 = vmatprep.subr.bf16.mxu0 0
    %48 = vmatpush1.bf16.msra.mxu0 0
    %49 = vmatprep.subr.bf16.mxu0 0
    %50 = vmatpush1.bf16.msra.mxu0 0
    %51 = vmatprep.subr.bf16.mxu0 0
    %52 = vmatpush1.bf16.msra.mxu0 0
    %53 = vmatprep.subr.bf16.mxu0 0
    %54 = vmatpush1.bf16.msra.mxu0 0
    %55 = vmatprep.subr.bf16.mxu0 0
    %56 = vmatpush1.bf16.msra.mxu0 0
    %57 = vmatprep.subr.bf16.mxu0 0
    %58 = vmatpush1.bf16.msra.mxu0 0
    %59 = vmatprep.subr.bf16.mxu0 0
    %60 = vmatpush1.bf16.msra.mxu0 0
    %61 = vmatprep.subr.bf16.mxu0 0
    %62 = vmatpush1.bf16.msra.mxu0 0
    %63 = vmatprep.subr.bf16.mxu0 0
    %64 = vmatpush1.bf16.msra.mxu0 0
    %65 = vmatprep.subr.bf16.mxu0 0
    %66 = vmatpush1.bf16.msra.mxu0 0
    %67 = vmatprep.subr.bf16.mxu0 0
    %68 = vmatpush1.bf16.msra.mxu0 0
    %69 = vmatprep.subr.bf16.mxu0 0
    %70 = vmatpush1.bf16.msra.mxu0 0
    %71 = vmatprep.mubr.bf16.mxu0 0
    %72 = vmatmul.mubr.bf16.gmra.mrb[0].mxu0 %v37
    %v73 = vpop.f32.mrb[0].mxu0
    %v74 = vadd.f32 0.0, %v73
    %v75 = vpop.f32.mrb[0].mxu0
    %v76 = vpop.f32.mrb[0].mxu0
    %v77 = vadd.f32 0.0, %v76
    %v78 = vpop.f32.mrb[0].mxu0
    %79 = vdwg.mxu0
    %v80 = vpack.c.bf16 %v77, %v74
    %v81 = vld [vmem:[%s2] sm:$0xf]
    %v82 = vld [vmem:[%s2 + $0x4] sm:$0xf]
    %v83 = vld [vmem:[%s2 + $0x8] sm:$0xf]
    %v84 = vld [vmem:[%s2 + $0xc] sm:$0xf]
    %v85 = vld [vmem:[%s2 + $0x10] sm:$0xf]
    %v86 = vld [vmem:[%s2 + $0x14] sm:$0xf]
    %v87 = vld [vmem:[%s2 + $0x18] sm:$0xf]
    %v88 = vld [vmem:[%s2 + $0x1c] sm:$0xf]
    %v89 = vld [vmem:[%s2 + $0x20] sm:$0xf]
    %v90 = vld [vmem:[%s2 + $0x24] sm:$0xf]
    %v91 = vld [vmem:[%s2 + $0x28] sm:$0xf]
    %v92 = vld [vmem:[%s2 + $0x2c] sm:$0xf]
    %v93 = vld [vmem:[%s2 + $0x30] sm:$0xf]
    %v94 = vld [vmem:[%s2 + $0x34] sm:$0xf]
    %v95 = vld [vmem:[%s2 + $0x38] sm:$0xf]
    %v96 = vld [vmem:[%s2 + $0x3c] sm:$0xf]
    %v113 = vunpack.c.l.b16 %v81
    %v114 = vunpack.c.l.b16 %v82
    %v115 = vunpack.c.l.b16 %v83
    %v116 = vunpack.c.l.b16 %v84
    %v117 = vunpack.c.l.b16 %v85
    %v118 = vunpack.c.l.b16 %v86
    %v119 = vunpack.c.l.b16 %v87
    %v120 = vunpack.c.l.b16 %v88
    %v121 = vunpack.c.l.b16 %v89
    %v122 = vunpack.c.l.b16 %v90
    %v123 = vunpack.c.l.b16 %v91
    %v124 = vunpack.c.l.b16 %v92
    %v125 = vunpack.c.l.b16 %v93
    %v126 = vunpack.c.l.b16 %v94
    %v127 = vunpack.c.l.b16 %v95
    %v128 = vunpack.c.l.b16 %v96
    %v129 = vpack.c.b16 %v114, %v113
    %v130 = vpack.c.b16 %v116, %v115
    %v131 = vpack.c.b16 %v118, %v117
    %v132 = vpack.c.b16 %v120, %v119
    %v133 = vpack.c.b16 %v122, %v121
    %v134 = vpack.c.b16 %v124, %v123
    %v135 = vpack.c.b16 %v126, %v125
    %v136 = vpack.c.b16 %v128, %v127
    %145 = vmatprep.subr.bf16.mxu0 0
    %146 = vmatpush1.bf16.msra.mxu0 %v129
    %147 = vmatprep.subr.bf16.mxu0 0
    %148 = vmatpush1.bf16.msra.mxu0 %v130
    %149 = vmatprep.subr.bf16.mxu0 0
    %150 = vmatpush1.bf16.msra.mxu0 %v131
    %151 = vmatprep.subr.bf16.mxu0 0
    %152 = vmatpush1.bf16.msra.mxu0 %v132
    %153 = vmatprep.subr.bf16.mxu0 0
    %154 = vmatpush1.bf16.msra.mxu0 %v133
    %155 = vmatprep.subr.bf16.mxu0 0
    %156 = vmatpush1.bf16.msra.mxu0 %v134
    %157 = vmatprep.subr.bf16.mxu0 0
    %158 = vmatpush1.bf16.msra.mxu0 %v135
    %159 = vmatprep.subr.bf16.mxu0 0
    %160 = vmatpush1.bf16.msra.mxu0 %v136
    %161 = vmatprep.subr.bf16.mxu0 0
    %162 = vmatpush1.bf16.msra.mxu0 0
    %163 = vmatprep.subr.bf16.mxu0 0
    %164 = vmatpush1.bf16.msra.mxu0 0
    %165 = vmatprep.subr.bf16.mxu0 0
    %166 = vmatpush1.bf16.msra.mxu0 0
    %167 = vmatprep.subr.bf16.mxu0 0
    %168 = vmatpush1.bf16.msra.mxu0 0
    %169 = vmatprep.subr.bf16.mxu0 0
    %170 = vmatpush1.bf16.msra.mxu0 0
    %171 = vmatprep.subr.bf16.mxu0 0
    %172 = vmatpush1.bf16.msra.mxu0 0
    %173 = vmatprep.subr.bf16.mxu0 0
    %174 = vmatpush1.bf16.msra.mxu0 0
    %175 = vmatprep.subr.bf16.mxu0 0
    %176 = vmatpush1.bf16.msra.mxu0 0
    %177 = vmatprep.mubr.bf16.mxu0 0
    %178 = vmatmul.mubr.bf16.gmra.mrb[0].mxu0 %v80
    %v179 = vpop.f32.mrb[0].mxu0
    %v180 = vadd.f32 0.0, %v179
    %v181 = vpop.f32.mrb[0].mxu0
    %v182 = vpop.f32.mrb[0].mxu0
    %v183 = vadd.f32 0.0, %v182
    %v184 = vpop.f32.mrb[0].mxu0
    %185 = vdwg.mxu0
    %v186 = vpack.c.bf16 %v183, %v180
    %v188 = vunpack.c.l.b16 %v186
    %v189 = vunpack.c.h.b16 %v186
    %v190 = vpack.c.b16 %v188, %v188
    %v191 = vpack.c.b16 %v189, %v189
    %vm194 = vcmask 257024
    %195 = vst.msk [vmem:[#allocation2] sm:$0xf] %vm194, %v190
    %196 = vst.msk [vmem:[#allocation2 + $0x4] sm:$0xf] %vm194, %v191
    // Predicated region
    $region14: #{_qlora_forward_impl.1} parent=1 // pred_check
      _
    $region15: #{_qlora_forward_impl.1} parent=1 // pred_check_branch
      %198 = sbr.rel (0) target = $region17
    $region16: #{_qlora_forward_impl.1} parent=1 // pred_region
      %s200 = ssub.s32 128, 128
      %201 = vsyncadd [#allocation3], %s200
      %s202 = sshll.u32 [#allocation2], 4
      %s203 = int_to_ptr.vmem [resolvable:$true] %s202
      %208 = dma.vmem_to_hbm [thread:$0]  %s203, 128, %s3, [#allocation3], 64, 64, 4
    $region17: #{_qlora_forward_impl.1} parent=1 // pred_fallthru
      _
    // Predicated region
    $region18: #{_qlora_forward_impl.1} parent=1 // pred_check
      _
    $region19: #{_qlora_forward_impl.1} parent=1 // pred_check_branch
      %210 = sbr.rel (0) target = $region21
    $region20: #{_qlora_forward_impl.1} parent=1 // pred_region
      %211 = dma.done [#allocation3], 128
    $region21: #{_qlora_forward_impl.1} parent=1 // pred_fallthru
      _
    %212 = vsyncpa [#allocation3], 1

</llo_original>
